<compile_context>
chip_gen: v6e
topology: v6e:2x2x1
jax: 0.10.0
libtpu: 0.0.40
codegen_flags: <defaults>
</compile_context>

<pallas_src>
import functools

import jax
import jax.numpy as jnp
from jax.experimental import pallas as pl
from jax.experimental.pallas import tpu as pltpu

EPS = 1e-12          # matches torch.nn.functional.normalize eps
NEG_BIG = -1e30      # finite "-inf": exp() underflows to 0.0 without NaN/Inf


def _round_up(x, m):
    return (x + m - 1) // m * m


def _inv_norm(x):
    """1 / max(||row||_2, EPS), computed in f32 (rsqrt => EUP, not a divide)."""
    x = x.astype(jnp.float32)
    ss = jnp.sum(x * x, axis=-1, keepdims=True)
    return jax.lax.rsqrt(jnp.maximum(ss, EPS * EPS))


def _mnsr_kernel(a_ref, c_ref, sinva_ref, invc_ref, cbias_ref, rmask_ref,
                 lse_ref, bmax_ref, bsum_ref,
                 m_scr, l_scr,
                 *, n_rows, has_col_pad, has_row_pad, reuse_exp):
    """One (anchor-row-tile bi, candidate-tile ci) grid step.

    a_ref     (BT, D)   anchor rows (matmul dtype; bf16 feeds the MXU directly)
    c_ref     (CT, D)   candidate rows
    sinva_ref (BT, 1)   f32  scale / ||anchor row||
    invc_ref  (1, CT)   f32  1 / ||candidate row||
    cbias_ref (1, CT)   f32  0 on valid columns, NEG_BIG on padded columns
    rmask_ref (BT, 1)   f32  1 on valid anchor rows, 0 on padded rows
    lse_ref   (BT, 1)   out: forward logsumexp per anchor row (last ci only)
    bmax_ref  (1,1,CT)  out: per-(row-tile, column) max of backward logits
    bsum_ref  (1,1,CT)  out: per-(row-tile, column) sum of exp(logit - max)
    m/l_scr   (BT, 1)   f32 running row max / row sum-exp
    """
    ci = pl.program_id(1)
    nci = pl.num_programs(1)
    bt = a_ref.shape[0]
    ct = c_ref.shape[0]

    @pl.when(ci == 0)
    def _init():
        m_scr[...] = jnp.full((bt, 1), NEG_BIG, jnp.float32)
        l_scr[...] = jnp.zeros((bt, 1), jnp.float32)

    # NT contraction on the MXU (both operands contract on D, no transpose),
    # f32 accumulation.  Cosine normalisation (scale folded into sinva) is
    # applied to the f32 result so the MXU can run in bf16.
    raw = jax.lax.dot_general(a_ref[...], c_ref[...],
                              (((1,), (1,)), ((), ())),
                              preferred_element_type=jnp.float32)     # (bt, ct)
    scores = raw * sinva_ref[...] * invc_ref[...]                     # (bt, ct)

    # Padded-column handling: one additive bias pass (0 / NEG_BIG) instead of
    # iota + compare + select; statically skipped when C is tile-aligned.
    if has_col_pad:
        s_fwd = scores + cbias_ref[...]
    else:
        s_fwd = scores

    # ---------------- forward CE: online logsumexp over candidates ----------
    m_prev = m_scr[...]
    m_new = jnp.maximum(m_prev, jnp.max(s_fwd, axis=-1, keepdims=True))
    p_fwd = jnp.exp(s_fwd - m_new)                                    # (bt, ct)
    l_scr[...] = (l_scr[...] * jnp.exp(m_prev - m_new)
                  + jnp.sum(p_fwd, axis=-1, keepdims=True))
    m_scr[...] = m_new

    # ------------- backward CE stats: only tiles owning columns < n_rows ----
    @pl.when(ci * ct < n_rows)
    def _bwd():
        # Padded anchor rows have scores == 0 exactly; letting them into the
        # max only raises cmax (safe for the wrapper-side merge); the sum
        # masks them out below.
        cmax = jnp.max(scores, axis=0, keepdims=True)                 # (1, ct)
        if reuse_exp:
            # exp(scores - cmax) == p_fwd * exp(m_new) * exp(-cmax).
            # Both factors bounded by exp(scale); only used when scale <= 40.
            row_scale = jnp.exp(m_new)                                # (bt, 1)
            if has_row_pad:
                row_scale = row_scale * rmask_ref[...]
            p_bwd = (p_fwd * row_scale) * jnp.exp(-cmax)
        else:
            p_bwd = jnp.exp(scores - cmax)
            if has_row_pad:
                p_bwd = p_bwd * rmask_ref[...]
        bmax_ref[...] = jnp.reshape(cmax, (1, 1, ct))
        bsum_ref[...] = jnp.reshape(jnp.sum(p_bwd, axis=0, keepdims=True),
                                    (1, 1, ct))

    @pl.when(ci * ct >= n_rows)
    def _no_bwd():
        bmax_ref[...] = jnp.full((1, 1, ct), NEG_BIG, jnp.float32)
        bsum_ref[...] = jnp.zeros((1, 1, ct), jnp.float32)

    # ---------------- finalize per-row forward logsumexp --------------------
    @pl.when(ci == nci - 1)
    def _finalize():
        lse_ref[...] = m_scr[...] + jnp.log(l_scr[...])


def _pick_tiles(B, C, D, itemsize, block_b, block_c, vmem_budget,
                num_row_shards):
    """Pick (block_b, block_c) under a VMEM budget; block_b as large as fits."""
    row_pack = {1: 32, 2: 16}.get(itemsize, 8)   # sublane pack of matmul dtype

    if block_c is None:
        bc = 1024                                # lane-dense, MXU-friendly
    else:
        bc = max(128, _round_up(block_c, 128))
    bc = min(bc, _round_up(C, 128))
    while 2 * bc * D * itemsize > max(vmem_budget // 3, 1) and bc > 128:
        bc = max(128, _round_up(bc // 2, 128))

    def est(bb):
        emb = 2 * (bb + bc) * D * itemsize       # double-buffered embedding tiles
        tmp = 4 * bb * bc * 4                    # (bt, ct) f32 intermediates
        vec = 8 * (bb + bc) * 4                  # per-row / per-col vectors
        return emb + tmp + vec

    if block_b is None:
        target = -(-_round_up(B, row_pack) // max(1, num_row_shards))
        bb = _round_up(max(row_pack, target), row_pack)
        while est(bb) > vmem_budget and bb > row_pack:
            bb = max(row_pack, _round_up(bb // 2, row_pack))
    else:
        bb = min(_round_up(block_b, row_pack), _round_up(B, row_pack))
    return bb, bc, est(bb)


def mnsr_loss(reps, *, scale=20.0, block_b=None, block_c=None,
              matmul_dtype=jnp.bfloat16, num_row_shards=1,
              vmem_limit_bytes=None, vmem_budget=40 * 1024 * 1024):
    """Forward pass of MultipleNegativesSymmetricRankingLoss on TPU.

    reps: [anchor, positive, *negatives] embeddings, each [batch, hidden].
    matmul_dtype: dtype fed to the MXU (default bf16 => full-rate MXU, f32
        accumulation and f32 normalisation); None keeps the input dtype.
    num_row_shards: set to 2 on v7x so the "parallel" anchor-row axis keeps an
        even tile count to shard across its two TensorCores.
    """
    anchor = reps[0]
    B, D = anchor.shape
    if reps[1].shape[0] != B:
        raise ValueError("positive batch size must match anchor batch size")

    # Inverse L2 norms in f32 from the *original* (pre-cast) embeddings.
    inv_a = _inv_norm(anchor)                               # (B, 1) f32
    cand_parts = list(reps[1:])
    inv_parts = [_inv_norm(r) for r in cand_parts]
    C = sum(int(r.shape[0]) for r in cand_parts)

    # Diagonal scores[j, j] = scale * cos_sim(anchor[j], positive[j]),
    # computed once in the wrapper (O(B*D) elementwise) instead of in-kernel.
    a32 = anchor.astype(jnp.float32)
    p32 = reps[1].astype(jnp.float32)
    diag = (jnp.sum(a32 * p32, axis=-1)
            * inv_a[:, 0] * inv_parts[0][:, 0] * scale)     # (B,)

    if matmul_dtype is not None:
        anchor = anchor.astype(matmul_dtype)
        cand_parts = [r.astype(matmul_dtype) for r in cand_parts]

    itemsize = jnp.dtype(anchor.dtype).itemsize
    block_b, block_c, est_bytes = _pick_tiles(
        B, C, D, itemsize, block_b, block_c, vmem_budget, num_row_shards)

    b_pad = _round_up(B, block_b)
    c_pad = _round_up(C, block_c)
    nbi = b_pad // block_b
    nci = c_pad // block_c
    has_row_pad = b_pad > B
    has_col_pad = c_pad > C

    if has_row_pad:
        anchor = jnp.pad(anchor, ((0, b_pad - B), (0, 0)))
        inv_a = jnp.pad(inv_a, ((0, b_pad - B), (0, 0)), constant_values=1.0)

    # TODO(synk): a fully zero-copy multi-rep path would pass each rep as its
    # own pallas_call input with a per-rep index_map instead of concatenating.
    candidates = (cand_parts[0] if len(cand_parts) == 1
                  else jnp.concatenate(cand_parts, axis=0))
    inv_c = (inv_parts[0] if len(inv_parts) == 1
             else jnp.concatenate(inv_parts, axis=0))
    if has_col_pad:
        candidates = jnp.pad(candidates, ((0, c_pad - C), (0, 0)))
        inv_c = jnp.pad(inv_c, ((0, c_pad - C), (0, 0)), constant_values=1.0)

    sinva = (inv_a * scale).astype(jnp.float32)                     # (b_pad, 1)
    invc_row = jnp.reshape(inv_c, (1, c_pad)).astype(jnp.float32)   # (1, c_pad)
    cbias = jnp.where(jnp.arange(c_pad) >= C, NEG_BIG,
                      0.0).astype(jnp.float32)[None, :]             # (1, c_pad)
    rmask = (jnp.arange(b_pad) < B).astype(jnp.float32)[:, None]    # (b_pad, 1)

    kernel = functools.partial(
        _mnsr_kernel, n_rows=B, has_col_pad=has_col_pad,
        has_row_pad=has_row_pad, reuse_exp=(float(scale) <= 40.0))

    if vmem_limit_bytes is None:
        # Raise v5e's 16 MiB default; stay below v7x's 64 MiB physical VMEM.
        vmem_limit_bytes = int(min(60 * 2**20, max(32 * 2**20, 2 * est_bytes)))

    lse, bmax, bsum = pl.pallas_call(
        kernel,
        out_shape=(
            jax.ShapeDtypeStruct((b_pad, 1), jnp.float32),       # forward lse
            jax.ShapeDtypeStruct((nbi, 1, c_pad), jnp.float32),  # bwd col max
            jax.ShapeDtypeStruct((nbi, 1, c_pad), jnp.float32),  # bwd col sum
        ),
        grid_spec=pltpu.PrefetchScalarGridSpec(
            num_scalar_prefetch=0,
            grid=(nbi, nci),
            in_specs=[
                pl.BlockSpec((block_b, D), lambda bi, ci: (bi, 0)),
                pl.BlockSpec((block_c, D), lambda bi, ci: (ci, 0)),
                pl.BlockSpec((block_b, 1), lambda bi, ci: (bi, 0)),
                pl.BlockSpec((1, block_c), lambda bi, ci: (0, ci)),
                pl.BlockSpec((1, block_c), lambda bi, ci: (0, ci)),
                pl.BlockSpec((block_b, 1), lambda bi, ci: (bi, 0)),
            ],
            out_specs=[
                pl.BlockSpec((block_b, 1), lambda bi, ci: (bi, 0)),
                pl.BlockSpec((1, 1, block_c), lambda bi, ci: (bi, 0, ci)),
                pl.BlockSpec((1, 1, block_c), lambda bi, ci: (bi, 0, ci)),
            ],
            scratch_shapes=[
                pltpu.VMEM((block_b, 1), jnp.float32),   # running row max
                pltpu.VMEM((block_b, 1), jnp.float32),   # running row sum-exp
            ],
        ),
        compiler_params=pltpu.CompilerParams(
            dimension_semantics=("parallel", "arbitrary"),
            vmem_limit_bytes=vmem_limit_bytes),
    )(anchor, candidates, sinva, invc_row, cbias, rmask)

    # Tiny O(B) / O(nbi * B) wrapper-side reductions.
    forward_loss = jnp.mean(lse[:B, 0] - diag)

    bm = bmax[:, 0, :B]                       # (nbi, B) partial column maxima
    bs = bsum[:, 0, :B]                       # (nbi, B) partial column sum-exp
    gmax = jnp.max(bm, axis=0)
    lse_bwd = jnp.log(jnp.sum(bs * jnp.exp(bm - gmax[None, :]), axis=0)) + gmax
    backward_loss = jnp.mean(lse_bwd - diag)

    return (forward_loss + backward_loss) * 0.5


def mnsr_loss_ref(reps, scale=20.0):
    """Pure-JAX reference mirroring the torch module (full-precision matmul)."""
    anchor = reps[0].astype(jnp.float32)
    candidates = jnp.concatenate([r.astype(jnp.float32) for r in reps[1:]],
                                 axis=0)
    scores = jnp.matmul(anchor, candidates.T,
                        precision=jax.lax.Precision.HIGHEST) * _inv_norm(anchor)
    scores = scores * _inv_norm(candidates)[:, 0][None, :] * scale
    b = anchor.shape[0]
    labels = jnp.arange(b)

    def ce(logits):
        lse = jax.nn.logsumexp(logits, axis=1)
        picked = jnp.take_along_axis(logits, labels[:, None], axis=1)[:, 0]
        return jnp.mean(lse - picked)

    return (ce(scores) + ce(scores[:, :b].T)) * 0.5


if __name__ == "__main__":
    # TODO(synk): the SentenceTransformer encoder producing `sentence_embedding`
    # is not reproduced; the loss kernel consumes synthetic embeddings directly.
    key = jax.random.PRNGKey(0)

    def make_reps(k, batch, hidden, n_reps):
        ks = jax.random.split(k, n_reps)
        return [jax.random.normal(kk, (batch, hidden), dtype=jnp.float32)
                for kk in ks]

    # 1) (anchor, positive) pairs, single tile, padded candidate columns,
    #    f32 MXU path (keep input dtype).
    reps = make_reps(key, 8, 32, 2)
    out = jax.block_until_ready(mnsr_loss(reps, matmul_dtype=None))
    ref = mnsr_loss_ref(reps)
    assert jnp.isfinite(out)
    assert jnp.allclose(out, ref, rtol=5e-3, atol=5e-2), (float(out), float(ref))

    # 2) (anchor, positive, negative) triplets, multi-tile grid (nbi=5, nci=2),
    #    padded anchor rows + padded candidate columns, cross-row-tile merge.
    key, sub = jax.random.split(key)
    reps = make_reps(sub, 70, 32, 3)
    out = jax.block_until_ready(
        mnsr_loss(reps, matmul_dtype=None, block_b=16, block_c=128))
    ref = mnsr_loss_ref(reps)
    assert jnp.isfinite(out)
    assert jnp.allclose(out, ref, rtol=5e-3, atol=5e-2), (float(out), float(ref))

    # 3) Default path: bf16-fed MXU, auto tile sizes — loose tolerance.
    key, sub = jax.random.split(key)
    reps = make_reps(sub, 16, 32, 2)
    out = jax.block_until_ready(mnsr_loss(reps))
    ref = mnsr_loss_ref(reps)
    assert jnp.isfinite(out)
    assert jnp.allclose(out, ref, rtol=0.0, atol=0.15), (float(out), float(ref))

    print("KERNEL_OK")
</pallas_src>

<mosaic_0001>
module attributes {stable_mosaic.version = 11 : i64} {
  func.func @_mnsr_kernel(%arg0: i32, %arg1: i32, %arg2: memref<8x32xf32, #tpu.memory_space<vmem>>, %arg3: memref<128x32xf32, #tpu.memory_space<vmem>>, %arg4: memref<8x1xf32, #tpu.memory_space<vmem>>, %arg5: memref<1x128xf32, #tpu.memory_space<vmem>>, %arg6: memref<1x128xf32, #tpu.memory_space<vmem>>, %arg7: memref<8x1xf32, #tpu.memory_space<vmem>>, %arg8: memref<8x1xf32, #tpu.memory_space<vmem>>, %arg9: memref<1x1x128xf32, #tpu.memory_space<vmem>>, %arg10: memref<1x1x128xf32, #tpu.memory_space<vmem>>, %arg11: memref<8x1xf32, #tpu.memory_space<vmem>>, %arg12: memref<8x1xf32, #tpu.memory_space<vmem>>) attributes {dimension_semantics = [#tpu.dimension_semantics<parallel>, #tpu.dimension_semantics<arbitrary>], iteration_bounds = array<i64: 1, 1>, scalar_prefetch = 0 : i64, scratch_operands = 2 : i64, tpu.core_type = #tpu.core_type<tc>, window_params = [{transform_indices = @transform_0, window_bounds = array<i64: 8, 32>}, {transform_indices = @transform_1, window_bounds = array<i64: 128, 32>}, {transform_indices = @transform_2, window_bounds = array<i64: 8, 1>}, {transform_indices = @transform_3, window_bounds = array<i64: 1, 128>}, {transform_indices = @transform_4, window_bounds = array<i64: 1, 128>}, {transform_indices = @transform_5, window_bounds = array<i64: 8, 1>}, {transform_indices = @transform_6, window_bounds = array<i64: 8, 1>}, {transform_indices = @transform_7, window_bounds = array<i64: 1, 1, 128>}, {transform_indices = @transform_8, window_bounds = array<i64: 1, 1, 128>}]} {
    %c0_i32 = arith.constant 0 : i32
    %0 = arith.cmpi eq, %arg1, %c0_i32 : i32
    %1 = arith.extui %0 : i1 to i32
    %c0_i32_0 = arith.constant 0 : i32
    %2 = arith.cmpi ne, %1, %c0_i32_0 : i32
    scf.if %2 {
      %cst_26 = arith.constant -1.000000e+30 : f32
      %42 = vector.broadcast %cst_26 : f32 to vector<8x1xf32>
      %c0_27 = arith.constant 0 : index
      %c0_28 = arith.constant 0 : index
      %43 = vector.load %arg11[%c0_27, %c0_28] : memref<8x1xf32, #tpu.memory_space<vmem>>, vector<8x1xf32>
      tpu.vector_store %arg11[%c0_27, %c0_28], %42 {strides = array<i32>} : memref<8x1xf32, #tpu.memory_space<vmem>>, vector<8x1xf32>,
      %cst_29 = arith.constant 0.000000e+00 : f32
      %44 = vector.broadcast %cst_29 : f32 to vector<8x1xf32>
      %c0_30 = arith.constant 0 : index
      %c0_31 = arith.constant 0 : index
      %45 = vector.load %arg12[%c0_30, %c0_31] : memref<8x1xf32, #tpu.memory_space<vmem>>, vector<8x1xf32>
      tpu.vector_store %arg12[%c0_30, %c0_31], %44 {strides = array<i32>} : memref<8x1xf32, #tpu.memory_space<vmem>>, vector<8x1xf32>,
    } else {
    }
    %c0 = arith.constant 0 : index
    %c0_1 = arith.constant 0 : index
    %3 = vector.load %arg2[%c0, %c0_1] : memref<8x32xf32, #tpu.memory_space<vmem>>, vector<8x32xf32>
    %c0_2 = arith.constant 0 : index
    %c0_3 = arith.constant 0 : index
    %4 = vector.load %arg3[%c0_2, %c0_3] : memref<128x32xf32, #tpu.memory_space<vmem>>, vector<128x32xf32>
    %cst = arith.constant dense<0.000000e+00> : vector<8x128xf32>
    %5 = tpu.matmul %3, %4, %cst {dimension_numbers = #tpu.dot_dimension_numbers<[1], [1], [0], [0], [0, 0, 1, 0], [], []>} : vector<8x32xf32>, vector<128x32xf32>, vector<8x128xf32> -> vector<8x128xf32>
    %c0_4 = arith.constant 0 : index
    %c0_5 = arith.constant 0 : index
    %6 = vector.load %arg4[%c0_4, %c0_5] : memref<8x1xf32, #tpu.memory_space<vmem>>, vector<8x1xf32>
    %7 = vector.broadcast %6 : vector<8x1xf32> to vector<8x128xf32>
    %8 = arith.mulf %5, %7 : vector<8x128xf32>
    %c0_6 = arith.constant 0 : index
    %c0_7 = arith.constant 0 : index
    %9 = vector.load %arg5[%c0_6, %c0_7] : memref<1x128xf32, #tpu.memory_space<vmem>>, vector<1x128xf32>
    %10 = vector.broadcast %9 : vector<1x128xf32> to vector<8x128xf32>
    %11 = arith.mulf %8, %10 : vector<8x128xf32>
    %c0_8 = arith.constant 0 : index
    %c0_9 = arith.constant 0 : index
    %12 = vector.load %arg6[%c0_8, %c0_9] : memref<1x128xf32, #tpu.memory_space<vmem>>, vector<1x128xf32>
    %13 = vector.broadcast %12 : vector<1x128xf32> to vector<8x128xf32>
    %14 = arith.addf %11, %13 : vector<8x128xf32>
    %c0_10 = arith.constant 0 : index
    %c0_11 = arith.constant 0 : index
    %15 = vector.load %arg11[%c0_10, %c0_11] : memref<8x1xf32, #tpu.memory_space<vmem>>, vector<8x1xf32>
    %cst_12 = arith.constant dense<0xFF800000> : vector<8xf32>
    %16 = vector.multi_reduction <maximumf>, %14, %cst_12 [1] : vector<8x128xf32> to vector<8xf32>
    %17 = vector.shape_cast %16 : vector<8xf32> to vector<8x1xf32>
    %18 = arith.maximumf %15, %17 : vector<8x1xf32>
    %19 = vector.broadcast %18 : vector<8x1xf32> to vector<8x128xf32>
    %20 = arith.subf %14, %19 : vector<8x128xf32>
    %21 = math.exp %20 : vector<8x128xf32>
    %c0_13 = arith.constant 0 : index
    %c0_14 = arith.constant 0 : index
    %22 = vector.load %arg12[%c0_13, %c0_14] : memref<8x1xf32, #tpu.memory_space<vmem>>, vector<8x1xf32>
    %23 = arith.subf %15, %18 : vector<8x1xf32>
    %24 = math.exp %23 : vector<8x1xf32>
    %25 = arith.mulf %22, %24 : vector<8x1xf32>
    %cst_15 = arith.constant dense<0.000000e+00> : vector<8xf32>
    %26 = vector.multi_reduction <add>, %21, %cst_15 [1] : vector<8x128xf32> to vector<8xf32>
    %27 = vector.shape_cast %26 : vector<8xf32> to vector<8x1xf32>
    %28 = arith.addf %25, %27 : vector<8x1xf32>
    %c0_16 = arith.constant 0 : index
    %c0_17 = arith.constant 0 : index
    %29 = vector.load %arg12[%c0_16, %c0_17] : memref<8x1xf32, #tpu.memory_space<vmem>>, vector<8x1xf32>
    tpu.vector_store %arg12[%c0_16, %c0_17], %28 {strides = array<i32>} : memref<8x1xf32, #tpu.memory_space<vmem>>, vector<8x1xf32>,
    %c0_18 = arith.constant 0 : index
    %c0_19 = arith.constant 0 : index
    %30 = vector.load %arg11[%c0_18, %c0_19] : memref<8x1xf32, #tpu.memory_space<vmem>>, vector<8x1xf32>
    tpu.vector_store %arg11[%c0_18, %c0_19], %18 {strides = array<i32>} : memref<8x1xf32, #tpu.memory_space<vmem>>, vector<8x1xf32>,
    %c128_i32 = arith.constant 128 : i32
    %31 = arith.muli %arg1, %c128_i32 : i32
    %c8_i32 = arith.constant 8 : i32
    %32 = arith.cmpi slt, %31, %c8_i32 : i32
    %33 = arith.extui %32 : i1 to i32
    %c0_i32_20 = arith.constant 0 : i32
    %34 = arith.cmpi ne, %33, %c0_i32_20 : i32
    scf.if %34 {
      %cst_26 = arith.constant dense<0xFF800000> : vector<128xf32>
      %42 = vector.multi_reduction <maximumf>, %11, %cst_26 [0] : vector<8x128xf32> to vector<128xf32>
      %43 = vector.shape_cast %42 : vector<128xf32> to vector<1x128xf32>
      %44 = math.exp %18 : vector<8x1xf32>
      %45 = vector.broadcast %44 : vector<8x1xf32> to vector<8x128xf32>
      %46 = arith.mulf %21, %45 : vector<8x128xf32>
      %cst_27 = arith.constant 0.000000e+00 : f32
      %47 = vector.broadcast %cst_27 : f32 to vector<1x128xf32>
      %48 = arith.subf %47, %43 : vector<1x128xf32>
      %49 = math.exp %48 : vector<1x128xf32>
      %50 = vector.broadcast %49 : vector<1x128xf32> to vector<8x128xf32>
      %51 = arith.mulf %46, %50 : vector<8x128xf32>
      %52 = vector.shape_cast %43 : vector<1x128xf32> to vector<1x1x128xf32>
      %c0_28 = arith.constant 0 : index
      %c0_29 = arith.constant 0 : index
      %c0_30 = arith.constant 0 : index
      %53 = vector.load %arg9[%c0_28, %c0_29, %c0_30] : memref<1x1x128xf32, #tpu.memory_space<vmem>>, vector<1x1x128xf32>
      tpu.vector_store %arg9[%c0_28, %c0_29, %c0_30], %52 {strides = array<i32>} : memref<1x1x128xf32, #tpu.memory_space<vmem>>, vector<1x1x128xf32>,
      %cst_31 = arith.constant dense<0.000000e+00> : vector<128xf32>
      %54 = vector.multi_reduction <add>, %51, %cst_31 [0] : vector<8x128xf32> to vector<128xf32>
      %55 = vector.shape_cast %54 : vector<128xf32> to vector<1x128xf32>
      %56 = vector.shape_cast %55 : vector<1x128xf32> to vector<1x1x128xf32>
      %c0_32 = arith.constant 0 : index
      %c0_33 = arith.constant 0 : index
      %c0_34 = arith.constant 0 : index
      %57 = vector.load %arg10[%c0_32, %c0_33, %c0_34] : memref<1x1x128xf32, #tpu.memory_space<vmem>>, vector<1x1x128xf32>
      tpu.vector_store %arg10[%c0_32, %c0_33, %c0_34], %56 {strides = array<i32>} : memref<1x1x128xf32, #tpu.memory_space<vmem>>, vector<1x1x128xf32>,
    } else {
    }
    %c128_i32_21 = arith.constant 128 : i32
    %35 = arith.muli %arg1, %c128_i32_21 : i32
    %c8_i32_22 = arith.constant 8 : i32
    %36 = arith.cmpi sge, %35, %c8_i32_22 : i32
    %37 = arith.extui %36 : i1 to i32
    %c0_i32_23 = arith.constant 0 : i32
    %38 = arith.cmpi ne, %37, %c0_i32_23 : i32
    scf.if %38 {
      %cst_26 = arith.constant -1.000000e+30 : f32
      %42 = vector.broadcast %cst_26 : f32 to vector<1x1x128xf32>
      %c0_27 = arith.constant 0 : index
      %c0_28 = arith.constant 0 : index
      %c0_29 = arith.constant 0 : index
      %43 = vector.load %arg9[%c0_27, %c0_28, %c0_29] : memref<1x1x128xf32, #tpu.memory_space<vmem>>, vector<1x1x128xf32>
      tpu.vector_store %arg9[%c0_27, %c0_28, %c0_29], %42 {strides = array<i32>} : memref<1x1x128xf32, #tpu.memory_space<vmem>>, vector<1x1x128xf32>,
      %cst_30 = arith.constant 0.000000e+00 : f32
      %44 = vector.broadcast %cst_30 : f32 to vector<1x1x128xf32>
      %c0_31 = arith.constant 0 : index
      %c0_32 = arith.constant 0 : index
      %c0_33 = arith.constant 0 : index
      %45 = vector.load %arg10[%c0_31, %c0_32, %c0_33] : memref<1x1x128xf32, #tpu.memory_space<vmem>>, vector<1x1x128xf32>
      tpu.vector_store %arg10[%c0_31, %c0_32, %c0_33], %44 {strides = array<i32>} : memref<1x1x128xf32, #tpu.memory_space<vmem>>, vector<1x1x128xf32>,
    } else {
    }
    %c0_i32_24 = arith.constant 0 : i32
    %39 = arith.cmpi eq, %arg1, %c0_i32_24 : i32
    %40 = arith.extui %39 : i1 to i32
    %c0_i32_25 = arith.constant 0 : i32
    %41 = arith.cmpi ne, %40, %c0_i32_25 : i32
    scf.if %41 {
      %c0_26 = arith.constant 0 : index
      %c0_27 = arith.constant 0 : index
      %42 = vector.load %arg11[%c0_26, %c0_27] : memref<8x1xf32, #tpu.memory_space<vmem>>, vector<8x1xf32>
      %c0_28 = arith.constant 0 : index
      %c0_29 = arith.constant 0 : index
      %43 = vector.load %arg12[%c0_28, %c0_29] : memref<8x1xf32, #tpu.memory_space<vmem>>, vector<8x1xf32>
      %44 = math.log %43 : vector<8x1xf32>
      %45 = arith.addf %42, %44 : vector<8x1xf32>
      %c0_30 = arith.constant 0 : index
      %c0_31 = arith.constant 0 : index
      %46 = vector.load %arg8[%c0_30, %c0_31] : memref<8x1xf32, #tpu.memory_space<vmem>>, vector<8x1xf32>
      tpu.vector_store %arg8[%c0_30, %c0_31], %45 {strides = array<i32>} : memref<8x1xf32, #tpu.memory_space<vmem>>, vector<8x1xf32>,
    } else {
    }
    return
  }
  func.func @transform_0(%arg0: i32, %arg1: i32) -> (i32, i32) {
    %c0_i32 = arith.constant 0 : i32
    %c0_i32_0 = arith.constant 0 : i32
    return %arg0, %c0_i32 : i32, i32
  }
  func.func @transform_1(%arg0: i32, %arg1: i32) -> (i32, i32) {
    %c0_i32 = arith.constant 0 : i32
    %c0_i32_0 = arith.constant 0 : i32
    return %arg1, %c0_i32 : i32, i32
  }
  func.func @transform_2(%arg0: i32, %arg1: i32) -> (i32, i32) {
    %c0_i32 = arith.constant 0 : i32
    %c0_i32_0 = arith.constant 0 : i32
    return %arg0, %c0_i32 : i32, i32
  }
  func.func @transform_3(%arg0: i32, %arg1: i32) -> (i32, i32) {
    %c0_i32 = arith.constant 0 : i32
    %c0_i32_0 = arith.constant 0 : i32
    return %c0_i32, %arg1 : i32, i32
  }
  func.func @transform_4(%arg0: i32, %arg1: i32) -> (i32, i32) {
    %c0_i32 = arith.constant 0 : i32
    %c0_i32_0 = arith.constant 0 : i32
    return %c0_i32, %arg1 : i32, i32
  }
  func.func @transform_5(%arg0: i32, %arg1: i32) -> (i32, i32) {
    %c0_i32 = arith.constant 0 : i32
    %c0_i32_0 = arith.constant 0 : i32
    return %arg0, %c0_i32 : i32, i32
  }
  func.func @transform_6(%arg0: i32, %arg1: i32) -> (i32, i32) {
    %c0_i32 = arith.constant 0 : i32
    %c0_i32_0 = arith.constant 0 : i32
    return %arg0, %c0_i32 : i32, i32
  }
  func.func @transform_7(%arg0: i32, %arg1: i32) -> (i32, i32, i32) {
    %c0_i32 = arith.constant 0 : i32
    %c0_i32_0 = arith.constant 0 : i32
    return %arg0, %c0_i32, %arg1 : i32, i32, i32
  }
  func.func @transform_8(%arg0: i32, %arg1: i32) -> (i32, i32, i32) {
    %c0_i32 = arith.constant 0 : i32
    %c0_i32_0 = arith.constant 0 : i32
    return %arg0, %c0_i32, %arg1 : i32, i32, i32
  }
}

</mosaic_0001>

<llo_original>
// kernel: tpu_custom_call.1
$region0: #{tpu_custom_call.1}
  #allocation0 [shape = 'u32[]', space=smem, size = 0x4, offset = 0x4, fixed_abs, tag = 'smem constant byte address 0x4 - core index']
  #allocation1 [shape = 'u32[144,128]{1,0:T(1,128)}', space=vmem, size = 0x12000, scoped, tag = 'internal scratch']
  #allocation2 [shape = 'f32[8,1]{1,0:T(8,128)}', space=vmem, size = 0x1000, scoped, tag = 'scratch operand']
  #allocation3 [shape = 'f32[8,1]{1,0:T(8,128)}', space=vmem, size = 0x1000, scoped, tag = 'scratch operand']
  %s0 = inlined_call_operand.vmem [shape: f32[8,32], index: 0, kind: input, shape index: {}]
  %s1 = inlined_call_operand.vmem [shape: f32[128,32], index: 1, kind: input, shape index: {}]
  %s2 = inlined_call_operand.vmem [shape: f32[8,1], index: 2, kind: input, shape index: {}]
  %s3 = inlined_call_operand.vmem [shape: f32[1,128], index: 3, kind: input, shape index: {}]
  %s4 = inlined_call_operand.vmem [shape: f32[1,128], index: 4, kind: input, shape index: {}]
  %s5 = inlined_call_operand.vmem [shape: f32[8,1], index: 5, kind: input, shape index: {}]
  %s6 = inlined_call_operand.vmem [shape: f32[8,1], index: 6, kind: output, shape index: {0}]
  %s7 = inlined_call_operand.hbm [shape: f32[1,1,128], index: 7, kind: output, shape index: {1}]
  %s8 = inlined_call_operand.hbm [shape: f32[1,1,128], index: 8, kind: output, shape index: {2}]
  %9 = xla_tuple %s6, %s7, %s8
  %s10 = sld [smem:[#allocation0]]
  $region66: #{tpu_custom_call.1} parent=0
    _
  %s12 = ssub.s32 1, %s10
  %s13 = scalar_select 0, %s12, %s10
  $region1: #{tpu_custom_call.1} parent=0
    #allocation4 [shape = 'u8[512]{0}', space=vmem, size = 0x400, scoped, tag = 'output window, operand 1, single buffered']
    #allocation5 [shape = 's32[1]{0}', space=sflag, size = 0x4, scoped, tag = 'scoped memory for tpu_custom_call.1']
    #allocation6 [shape = 'u8[512]{0}', space=vmem, size = 0x400, scoped, tag = 'output window, operand 2, single buffered']
    #allocation7 [shape = 's32[1]{0}', space=sflag, size = 0x4, scoped, tag = 'scoped memory for tpu_custom_call.1']
    %14 = vsyncpa [#allocation5], 0
    %15 = vsyncpa [#allocation7], 0
    // Predicated region
    $region2: #{tpu_custom_call.1} parent=1 // pred_check
      _
    $region3: #{tpu_custom_call.1} parent=1 // pred_check_branch
      %17 = sbr.rel (0) target = $region5
    $region4: #{tpu_custom_call.1} parent=1 // pred_region
      _
    $region5: #{tpu_custom_call.1} parent=1 // pred_fallthru
      _
    // Predicated region
    $region6: #{tpu_custom_call.1} parent=1 // pred_check
      _
    $region7: #{tpu_custom_call.1} parent=1 // pred_check_branch
      %19 = sbr.rel (0) target = $region9
    $region8: #{tpu_custom_call.1} parent=1 // pred_region
      _
    $region9: #{tpu_custom_call.1} parent=1 // pred_fallthru
      _
    // Predicated region
    $region10: #{tpu_custom_call.1} parent=1 // pred_check
      _
    $region11: #{tpu_custom_call.1} parent=1 // pred_check_branch
      %21 = sbr.rel (0) target = $region13
    $region12: #{tpu_custom_call.1} parent=1 // pred_region
      _
    $region13: #{tpu_custom_call.1} parent=1 // pred_fallthru
      _
    // Predicated region
    $region14: #{tpu_custom_call.1} parent=1 // pred_check
      _
    $region15: #{tpu_custom_call.1} parent=1 // pred_check_branch
      %23 = sbr.rel (0) target = $region17
    $region16: #{tpu_custom_call.1} parent=1 // pred_region
      _
    $region17: #{tpu_custom_call.1} parent=1 // pred_fallthru
      _
    // Predicated region
    $region18: #{tpu_custom_call.1} parent=1 // pred_check
      _
    $region19: #{tpu_custom_call.1} parent=1 // pred_check_branch
      %25 = sbr.rel (0) target = $region21
    $region20: #{tpu_custom_call.1} parent=1 // pred_region
      _
    $region21: #{tpu_custom_call.1} parent=1 // pred_fallthru
      _
    // Predicated region
    $region22: #{tpu_custom_call.1} parent=1 // pred_check
      _
    $region23: #{tpu_custom_call.1} parent=1 // pred_check_branch
      %27 = sbr.rel (0) target = $region25
    $region24: #{tpu_custom_call.1} parent=1 // pred_region
      _
    $region25: #{tpu_custom_call.1} parent=1 // pred_fallthru
      _
    %p28 = scmp.eq.s32.totalorder 0, 0
    // Predicated region
    $region26: #{tpu_custom_call.1} parent=1 // pred_check
      %p29 = pneg %p28
    $region27: #{tpu_custom_call.1} parent=1 // pred_check_branch
      %31 = sbr.rel (%p29) target = $region29
    $region28: #{tpu_custom_call.1} parent=1 // pred_region
      %vm32 = vcmask 7168
      %33 = vst.msk [vmem:[#allocation2] sm:$0xff] %vm32, -1e+30
      %34 = vst.msk [vmem:[#allocation3] sm:$0xff] %vm32, 0.0
    $region29: #{tpu_custom_call.1} parent=1 // pred_fallthru
      _
    %v35 = vld [vmem:[%s0] sm:$0xff]
    %v36 = vld [vmem:[%s1] sm:$0xff]
    %v37 = vld [vmem:[%s1 + $0x8] sm:$0xff]
    %v38 = vld [vmem:[%s1 + $0x10] sm:$0xff]
    %v39 = vld [vmem:[%s1 + $0x18] sm:$0xff]
    %v40 = vld [vmem:[%s1 + $0x20] sm:$0xff]
    %v41 = vld [vmem:[%s1 + $0x28] sm:$0xff]
    %v42 = vld [vmem:[%s1 + $0x30] sm:$0xff]
    %v43 = vld [vmem:[%s1 + $0x38] sm:$0xff]
    %v44 = vld [vmem:[%s1 + $0x40] sm:$0xff]
    %v45 = vld [vmem:[%s1 + $0x48] sm:$0xff]
    %v46 = vld [vmem:[%s1 + $0x50] sm:$0xff]
    %v47 = vld [vmem:[%s1 + $0x58] sm:$0xff]
    %v48 = vld [vmem:[%s1 + $0x60] sm:$0xff]
    %v49 = vld [vmem:[%s1 + $0x68] sm:$0xff]
    %v50 = vld [vmem:[%s1 + $0x70] sm:$0xff]
    %v51 = vld [vmem:[%s1 + $0x78] sm:$0xff]
    %vm52 = vcmask 261120
    %v54 = vsel %vm52, %v35, 0
    %v57 = vsel %vm52, %v36, 0
    %v60 = vsel %vm52, %v37, 0
    %v63 = vsel %vm52, %v38, 0
    %v66 = vsel %vm52, %v39, 0
    %v69 = vsel %vm52, %v40, 0
    %v72 = vsel %vm52, %v41, 0
    %v75 = vsel %vm52, %v42, 0
    %v78 = vsel %vm52, %v43, 0
    %v81 = vsel %vm52, %v44, 0
    %v84 = vsel %vm52, %v45, 0
    %v87 = vsel %vm52, %v46, 0
    %v90 = vsel %vm52, %v47, 0
    %v93 = vsel %vm52, %v48, 0
    %v96 = vsel %vm52, %v49, 0
    %v99 = vsel %vm52, %v50, 0
    %v102 = vsel %vm52, %v51, 0
    %104 = vmatprep.subr.mxu0 0.0
    %105 = vmatpush1.xpose.msra.mxu0 %v102
    %106 = vmatprep.subr.mxu0 0.0
    %107 = vmatpush1.xpose.msra.mxu0 %v99
    %108 = vmatprep.subr.mxu0 0.0
    %109 = vmatpush1.xpose.msra.mxu0 %v96
    %110 = vmatprep.subr.mxu0 0.0
    %111 = vmatpush1.xpose.msra.mxu0 %v93
    %112 = vmatprep.subr.mxu0 0.0
    %113 = vmatpush1.xpose.msra.mxu0 %v90
    %114 = vmatprep.subr.mxu0 0.0
    %115 = vmatpush1.xpose.msra.mxu0 %v87
    %116 = vmatprep.subr.mxu0 0.0
    %117 = vmatpush1.xpose.msra.mxu0 %v84
    %118 = vmatprep.subr.mxu0 0.0
    %119 = vmatpush1.xpose.msra.mxu0 %v81
    %120 = vmatprep.subr.mxu0 0.0
    %121 = vmatpush1.xpose.msra.mxu0 %v78
    %122 = vmatprep.subr.mxu0 0.0
    %123 = vmatpush1.xpose.msra.mxu0 %v75
    %124 = vmatprep.subr.mxu0 0.0
    %125 = vmatpush1.xpose.msra.mxu0 %v72
    %126 = vmatprep.subr.mxu0 0.0
    %127 = vmatpush1.xpose.msra.mxu0 %v69
    %128 = vmatprep.subr.mxu0 0.0
    %129 = vmatpush1.xpose.msra.mxu0 %v66
    %130 = vmatprep.subr.mxu0 0.0
    %131 = vmatpush1.xpose.msra.mxu0 %v63
    %132 = vmatprep.subr.mxu0 0.0
    %133 = vmatpush1.xpose.msra.mxu0 %v60
    %134 = vmatprep.subr.mxu0 0.0
    %135 = vmatpush1.xpose.msra.mxu0 %v57
    %136 = vmatprep.subr.mxu0 0.0
    %137 = vmatpush2.xpose.msra.mxu0 0.0
    %138 = vmatprep.subr.mxu0 0.0
    %139 = vmatpush2.xpose.msra.mxu0 0.0
    %140 = vmatprep.subr.mxu0 0.0
    %141 = vmatpush2.xpose.msra.mxu0 0.0
    %142 = vmatprep.subr.mxu0 0.0
    %143 = vmatpush2.xpose.msra.mxu0 0.0
    %144 = vmatprep.subr.mxu0 0.0
    %145 = vmatpush2.xpose.msra.mxu0 0.0
    %146 = vmatprep.subr.mxu0 0.0
    %147 = vmatpush2.xpose.msra.mxu0 0.0
    %148 = vmatprep.subr.mxu0 0.0
    %149 = vmatpush2.xpose.msra.mxu0 0.0
    %150 = vmatprep.subr.mxu0 0.0
    %151 = vmatpush2.xpose.msra.mxu0 0.0
    %152 = vmatprep.subr.mxu0 0.0
    %153 = vmatpush2.xpose.msra.mxu0 0.0
    %154 = vmatprep.subr.mxu0 0.0
    %155 = vmatpush2.xpose.msra.mxu0 0.0
    %156 = vmatprep.subr.mxu0 0.0
    %157 = vmatpush2.xpose.msra.mxu0 0.0
    %158 = vmatprep.subr.mxu0 0.0
    %159 = vmatpush2.xpose.msra.mxu0 0.0
    %160 = vmatprep.subr.mxu0 0.0
    %161 = vmatpush2.xpose.msra.mxu0 0.0
    %162 = vmatprep.subr.mxu0 0.0
    %163 = vmatpush2.xpose.msra.mxu0 0.0
    %164 = vmatprep.subr.mxu0 0.0
    %165 = vmatpush2.xpose.msra.mxu0 0.0
    %166 = vmatprep.subr.mxu0 0.0
    %167 = vmatpush2.xpose.msra.mxu0 0.0
    %168 = vmatprep.mubr.f32.mxu0 0.0
    %169 = vmatmul.mubr.f32.gmra.mxu0 %v54
    %v170 = vpop.f32.mrf.mxu0
    %v171 = vadd.f32 0.0, %v170
    %v172 = vpop.f32.mrf.mxu0
    %173 = vdwg.mxu0
    %v174 = vld [vmem:[%s2] sm:$0xff]
    %176 = vset.pattern.permute.xlu0 0
    %177 = vperm.xlu0 %176, %v174
    %v178 = vpop.permute.xlu0 %177
    %v180 = vmul.f32 %v171, %v178
    %v181 = vld [vmem:[%s3] sm:$0x1]
    %v183 = vlaneseq
    %v184 = vshrl.u32 %v183, 7
    %v185 = vsub.s32 0, %v184
    %v186 = vrot.slane %v181, %v185
    %v188 = vmul.f32 %v180, %v186
    %v189 = vld [vmem:[%s4] sm:$0x1]
    %v191 = vlaneseq
    %v192 = vshrl.u32 %v191, 7
    %v193 = vsub.s32 0, %v192
    %v194 = vrot.slane %v189, %v193
    %v196 = vadd.f32 %v188, %v194
    %v197 = vld [vmem:[#allocation2] sm:$0xff]
    %198 = vmax.xlane.f32.xlu0 %v196
    %v199 = vpop.xlane.xlu0 %198
    %v200 = vmax.f32 %v197, %v199
    %202 = vset.pattern.permute.xlu0 0
    %203 = vperm.xlu0 %202, %v200
    %v204 = vpop.permute.xlu0 %203
    %v206 = vsub.f32 %v196, %v204
    %v207 = vmul.f32 %v206, 1.442695
    %v208 = vpow.pop %v207
    %v209 = vld [vmem:[#allocation3] sm:$0xff]
    %v210 = vsub.f32 %v197, %v200
    %v211 = vmul.f32 %v210, 1.442695
    %v212 = vpow.pop %v211
    %v213 = vmul.f32 %v209, %v212
    %214 = vadd.xlane.f32.xlu0 %v208
    %v215 = vpop.xlane.xlu0 %214
    %v216 = vadd.f32 %v213, %v215
    %vm217 = vcmask 7168
    %218 = vst.msk [vmem:[#allocation3] sm:$0xff] %vm217, %v216
    %219 = vst.msk [vmem:[#allocation2] sm:$0xff] %vm217, %v200
    %s220 = smul.u32 0, 128
    %p221 = scmp.lt.s32.totalorder %s220, 8
    // Predicated region
    $region30: #{tpu_custom_call.1} parent=1 // pred_check
      %p222 = pneg %p221
    $region31: #{tpu_custom_call.1} parent=1 // pred_check_branch
      %224 = sbr.rel (%p222) target = $region33
    $region32: #{tpu_custom_call.1} parent=1 // pred_region
      %v225 = vrot.slane %v188, 4
      %v226 = vmax.f32 %v188, %v225
      %v227 = vrot.slane %v226, 2
      %v228 = vmax.f32 %v226, %v227
      %v229 = vrot.slane %v228, 1
      %v230 = vmax.f32 %v228, %v229
      %v231 = vmul.f32 %v200, 1.442695
      %v232 = vpow.pop %v231
      %234 = vset.pattern.permute.xlu0 0
      %235 = vperm.xlu0 %234, %v232
      %v236 = vpop.permute.xlu0 %235
      %v238 = vmul.f32 %v208, %v236
      %v239 = vsub.f32 0.0, %v230
      %v240 = vmul.f32 %v239, 1.442695
      %v241 = vpow.pop %v240
      %v242 = vmul.f32 %v238, %v241
      %243 = vst [vmem:[#allocation4] sm:$0x1] %v230
      %v244 = vrot.slane %v242, 4
      %v245 = vadd.f32 %v242, %v244
      %v246 = vrot.slane %v245, 2
      %v247 = vadd.f32 %v245, %v246
      %v248 = vrot.slane %v247, 1
      %v249 = vadd.f32 %v247, %v248
      %250 = vst [vmem:[#allocation6] sm:$0x1] %v249
    $region33: #{tpu_custom_call.1} parent=1 // pred_fallthru
      _
    %p251 = scmp.ge.s32.totalorder %s220, 8
    // Predicated region
    $region34: #{tpu_custom_call.1} parent=1 // pred_check
      %p252 = pneg %p251
    $region35: #{tpu_custom_call.1} parent=1 // pred_check_branch
      %254 = sbr.rel (%p252) target = $region37
    $region36: #{tpu_custom_call.1} parent=1 // pred_region
      %255 = vst [vmem:[#allocation4] sm:$0x1] -1e+30
      %256 = vst [vmem:[#allocation6] sm:$0x1] 0.0
    $region37: #{tpu_custom_call.1} parent=1 // pred_fallthru
      _
    // Predicated region
    $region38: #{tpu_custom_call.1} parent=1 // pred_check
      %p257 = pneg %p28
    $region39: #{tpu_custom_call.1} parent=1 // pred_check_branch
      %259 = sbr.rel (%p257) target = $region41
    $region40: #{tpu_custom_call.1} parent=1 // pred_region
      %v260 = vld [vmem:[#allocation2] sm:$0xff]
      %v261 = vld [vmem:[#allocation3] sm:$0xff]
      %v262 = vlog2.pop %v261
      %v263 = vmul.f32 %v262, 0.6931472
      %v264 = vadd.f32 %v260, %v263
      %265 = vst.msk [vmem:[%s6] sm:$0xff] %vm217, %v264
    $region41: #{tpu_custom_call.1} parent=1 // pred_fallthru
      _
    // Predicated region
    $region42: #{tpu_custom_call.1} parent=1 // pred_check
      _
    $region43: #{tpu_custom_call.1} parent=1 // pred_check_branch
      %267 = sbr.rel (0) target = $region45
    $region44: #{tpu_custom_call.1} parent=1 // pred_region
      _
    $region45: #{tpu_custom_call.1} parent=1 // pred_fallthru
      _
    // Predicated region
    $region46: #{tpu_custom_call.1} parent=1 // pred_check
      _
    $region47: #{tpu_custom_call.1} parent=1 // pred_check_branch
      %269 = sbr.rel (0) target = $region49
    $region48: #{tpu_custom_call.1} parent=1 // pred_region
      %s271 = ssub.s32 16, 16
      %272 = vsyncadd [#allocation5], %s271
      %s274 = sshll.u32 [#allocation4], 4
      %s275 = int_to_ptr.vmem [resolvable:$true] %s274
      %277 = dma.vmem_to_hbm [thread:$0]  %s275, 16, %s7, [#allocation5]
    $region49: #{tpu_custom_call.1} parent=1 // pred_fallthru
      _
    // Predicated region
    $region50: #{tpu_custom_call.1} parent=1 // pred_check
      _
    $region51: #{tpu_custom_call.1} parent=1 // pred_check_branch
      %279 = sbr.rel (0) target = $region53
    $region52: #{tpu_custom_call.1} parent=1 // pred_region
      %s281 = ssub.s32 16, 16
      %282 = vsyncadd [#allocation7], %s281
      %s284 = sshll.u32 [#allocation6], 4
      %s285 = int_to_ptr.vmem [resolvable:$true] %s284
      %287 = dma.vmem_to_hbm [thread:$0]  %s285, 16, %s8, [#allocation7]
    $region53: #{tpu_custom_call.1} parent=1 // pred_fallthru
      _
    // Predicated region
    $region54: #{tpu_custom_call.1} parent=1 // pred_check
      _
    $region55: #{tpu_custom_call.1} parent=1 // pred_check_branch
      %289 = sbr.rel (0) target = $region57
    $region56: #{tpu_custom_call.1} parent=1 // pred_region
      _
    $region57: #{tpu_custom_call.1} parent=1 // pred_fallthru
      _
    // Predicated region
    $region58: #{tpu_custom_call.1} parent=1 // pred_check
      _
    $region59: #{tpu_custom_call.1} parent=1 // pred_check_branch
      %291 = sbr.rel (0) target = $region61
    $region60: #{tpu_custom_call.1} parent=1 // pred_region
      %292 = dma.done [#allocation5], 16
    $region61: #{tpu_custom_call.1} parent=1 // pred_fallthru
      _
    // Predicated region
    $region62: #{tpu_custom_call.1} parent=1 // pred_check
      _
    $region63: #{tpu_custom_call.1} parent=1 // pred_check_branch
      %294 = sbr.rel (0) target = $region65
    $region64: #{tpu_custom_call.1} parent=1 // pred_region
      %295 = dma.done [#allocation7], 16
    $region65: #{tpu_custom_call.1} parent=1 // pred_fallthru
      _
    %296 = vsyncpa [#allocation5], 1
    %297 = vsyncpa [#allocation7], 1

</llo_original>
